<compile_context>
chip_gen: v7x
topology: tpu7x:2x2x1
jax: 0.10.0
libtpu: 0.0.40
codegen_flags: <defaults>
</compile_context>

<pallas_src>
import functools

import jax
import jax.numpy as jnp
from jax.experimental import pallas as pl
from jax.experimental.pallas import tpu as pltpu


# ----------------------------------------------------------------------------
# Kernels
# ----------------------------------------------------------------------------

def _residual(gate_f32, x1, x2, out_dtype, elementwise_bf16):
    """out = x1 + gate * (x2 - x1)  (one mul / two adds per element)."""
    if elementwise_bf16:
        g = gate_f32.astype(jnp.bfloat16)
        x1e = x1.astype(jnp.bfloat16)
        x2e = x2.astype(jnp.bfloat16)
        out = x1e + g * (x2e - x1e)
    else:
        x1e = x1.astype(jnp.float32)
        x2e = x2.astype(jnp.float32)
        out = x1e + gate_f32 * (x2e - x1e)
    return out.astype(out_dtype)


def highway_kernel_resident(x1_ref, x2_ref, w_ref, b_ref, o_ref, *,
                            elementwise_bf16):
    # x1/x2: (tile, H)   w: (H, H_out) resident   b: (1, H_out) f32
    x1 = x1_ref[...]
    x2 = x2_ref[...]
    # Let jnp.dot promote mixed dtypes: bf16 x bf16 -> full-rate MXU with f32
    # accumulate; an f32 lhs is never downcast.
    z = jnp.dot(x1, w_ref[...], preferred_element_type=jnp.float32)
    gate = jax.nn.sigmoid(z + b_ref[...])          # EUP transcendental, f32
    o_ref[...] = _residual(gate, x1, x2, o_ref.dtype, elementwise_bf16)


def highway_kernel_ktiled(x1k_ref, x1_ref, x2_ref, w_ref, b_ref, o_ref,
                          acc_ref, *, elementwise_bf16):
    # grid = (row_tiles, k_tiles); k is the reduction axis ("arbitrary").
    k = pl.program_id(1)

    @pl.when(k == 0)
    def _():
        acc_ref[...] = jnp.zeros_like(acc_ref)

    acc_ref[...] += jnp.dot(x1k_ref[...], w_ref[...],
                            preferred_element_type=jnp.float32)

    @pl.when(k == pl.num_programs(1) - 1)
    def _():
        gate = jax.nn.sigmoid(acc_ref[...] + b_ref[...])
        o_ref[...] = _residual(gate, x1_ref[...], x2_ref[...], o_ref.dtype,
                               elementwise_bf16)


# ----------------------------------------------------------------------------
# Wrapper
# ----------------------------------------------------------------------------

def _round_up(x, m):
    return ((x + m - 1) // m) * m


def _round_down(x, m):
    return max(m, (x // m) * m)


def _sublane_granule(dtype):
    # 16-bit dtypes pack two rows per sublane.
    return 16 if jnp.dtype(dtype).itemsize == 2 else 8


def _tpu_info():
    kind = ""
    try:
        kind = jax.devices()[0].device_kind.lower()
    except Exception:
        pass
    is_v7 = ("v7" in kind) or ("7x" in kind)
    vmem_cap = None
    try:
        vmem_cap = int(pltpu.get_tpu_info().vmem_capacity_bytes)
    except Exception:
        vmem_cap = None
    if vmem_cap is None or vmem_cap <= 0:
        vmem_cap = (64 << 20) if is_v7 else (128 << 20)
    # v5e and older have no bf16 VALUs -> keep the elementwise tail in f32.
    has_bf16_vpu = not any(v in kind for v in ("v2", "v3", "v4", "v5"))
    return vmem_cap, has_bf16_vpu, is_v7


def highway(x1, x2, w_t, b, *, target_block_bytes=None,
            force_ktiled=False, block_k=None):
    """Highway forward.

    x1, x2 : [N, H]      inputs (bf16 recommended for full MXU rate)
    w_t    : [H, H_out]  Linear weight, pre-transposed (y = x1 @ w_t + b)
    b      : [H_out]     Linear bias
    Requires H_out == H (the PyTorch module's gated residual).
    """
    N, H = x1.shape
    H_in, H_out = w_t.shape
    assert H == H_in and H == H_out, "Highway requires x_out_channels == x_hidden"
    assert x2.shape == (N, H)

    vmem_cap, has_bf16_vpu, is_v7 = _tpu_info()
    vmem_budget = int(0.7 * vmem_cap)

    out_dtype = x1.dtype
    elementwise_bf16 = bool(has_bf16_vpu
                            and x1.dtype == jnp.bfloat16
                            and x2.dtype == jnp.bfloat16)

    isz1 = jnp.dtype(x1.dtype).itemsize
    isz2 = jnp.dtype(x2.dtype).itemsize
    osz = jnp.dtype(out_dtype).itemsize
    wsz = jnp.dtype(w_t.dtype).itemsize
    sub = max(_sublane_granule(x1.dtype), _sublane_granule(x2.dtype))

    if target_block_bytes is None:
        # MiB-scale input blocks (~85% HBM roofline); smaller on v7x (64 MiB VMEM).
        target_block_bytes = (2 << 20) if is_v7 else (4 << 20)

    # ---- row tile: sized by bytes; never a 1-step grid when N allows it ----
    tile = max(sub, (target_block_bytes // max(1, H * isz1) // sub) * sub)
    if N >= 2 * sub:
        tile = min(tile, _round_up(pl.cdiv(N, 2), sub))   # >= 2 steps (v7x megacore)
    else:
        tile = min(tile, N)                                # single full-extent block

    b2d = b.reshape(1, H_out).astype(jnp.float32)

    def resident_bytes(t):
        return (2 * t * (H * isz1 + H * isz2 + H_out * osz)   # x1,x2,out (2 bufs each)
                + H * H_out * wsz + H_out * 4)                # resident W + bias

    # K-tile size for the streamed-weight path (must divide H).
    tk = None
    if block_k is not None and H % int(block_k) == 0:
        tk = int(block_k)
    else:
        for cand in (512, 256, 128):
            if H % cand == 0:
                tk = cand
                break

    use_ktiled = force_ktiled or resident_bytes(sub) > vmem_budget
    if tk is None:
        # TODO(synk): H not a multiple of 128 with a weight too large to keep
        # resident has no K-tiled fallback here; the resident path is used and
        # may exceed the scoped VMEM limit.
        use_ktiled = False

    # TODO(synk): for H_out < 128 (the module's real H=32) every store is a
    # masked vst at partial lane occupancy; batching rows into a lane-dense
    # [N*H/128, 128] elementwise phase (or plain XLA fusion) would beat this.
    # TODO(synk): pass input_output_aliases={0: 0} when the caller donates x1.

    if not use_ktiled:
        # -------------------- resident-weight path --------------------
        while tile > sub and resident_bytes(tile) > vmem_budget:
            tile = max(sub, _round_down(tile // 2, sub))
        grid_n = pl.cdiv(N, tile)
        one_step = grid_n == 1
        footprint = resident_bytes(tile)
        vmem_limit = int(min(vmem_cap, max(32 << 20, footprint + (8 << 20))))

        if one_step:
            # Double-buffering a 1-step grid just wastes VMEM.
            x1_spec = pl.BlockSpec((tile, H), lambda i: (i, 0),
                                   pipeline_mode=pl.Buffered(1))
            x2_spec = pl.BlockSpec((tile, H), lambda i: (i, 0),
                                   pipeline_mode=pl.Buffered(1))
        else:
            x1_spec = pl.BlockSpec((tile, H), lambda i: (i, 0))
            x2_spec = pl.BlockSpec((tile, H), lambda i: (i, 0))

        kernel = functools.partial(highway_kernel_resident,
                                   elementwise_bf16=elementwise_bf16)
        return pl.pallas_call(
            kernel,
            out_shape=jax.ShapeDtypeStruct((N, H_out), out_dtype),
            grid_spec=pltpu.PrefetchScalarGridSpec(
                num_scalar_prefetch=0,
                grid=(grid_n,),
                in_specs=[
                    x1_spec,
                    x2_spec,
                    pl.BlockSpec((H_in, H_out), lambda i: (0, 0),     # W (resident)
                                 pipeline_mode=pl.Buffered(1)),
                    pl.BlockSpec((1, H_out), lambda i: (0, 0),        # bias (resident)
                                 pipeline_mode=pl.Buffered(1)),
                ],
                out_specs=pl.BlockSpec((tile, H_out), lambda i: (i, 0)),
            ),
            compiler_params=pltpu.CompilerParams(
                dimension_semantics=("parallel",),
                vmem_limit_bytes=vmem_limit),
        )(x1, x2, w_t, b2d)

    # ---------------------- K-tiled (streamed-weight) path ----------------------
    def ktiled_bytes(t):
        return (2 * t * tk * isz1                       # x1 k-slices (2 bufs)
                + 2 * t * (H * isz1 + H * isz2)         # full-width x1, x2
                + 2 * t * H_out * osz                   # out
                + t * H_out * 4                         # f32 accumulator
                + 2 * tk * H_out * wsz + H_out * 4)     # streamed W + bias

    while tile > sub and ktiled_bytes(tile) > vmem_budget:
        tile = max(sub, _round_down(tile // 2, sub))
    grid_n = pl.cdiv(N, tile)
    grid_k = H // tk
    one_step = grid_n == 1
    footprint = ktiled_bytes(tile)
    vmem_limit = int(min(vmem_cap, max(32 << 20, footprint + (8 << 20))))

    if one_step:
        x1_full_spec = pl.BlockSpec((tile, H), lambda i, k: (i, 0),
                                    pipeline_mode=pl.Buffered(1))
        x2_full_spec = pl.BlockSpec((tile, H), lambda i, k: (i, 0),
                                    pipeline_mode=pl.Buffered(1))
    else:
        x1_full_spec = pl.BlockSpec((tile, H), lambda i, k: (i, 0))
        x2_full_spec = pl.BlockSpec((tile, H), lambda i, k: (i, 0))

    kernel = functools.partial(highway_kernel_ktiled,
                               elementwise_bf16=elementwise_bf16)
    return pl.pallas_call(
        kernel,
        out_shape=jax.ShapeDtypeStruct((N, H_out), out_dtype),
        grid_spec=pltpu.PrefetchScalarGridSpec(
            num_scalar_prefetch=0,
            grid=(grid_n, grid_k),
            in_specs=[
                pl.BlockSpec((tile, tk), lambda i, k: (i, k)),        # x1 k-slice (lhs)
                x1_full_spec,                                         # x1 full (residual)
                x2_full_spec,                                         # x2 full (residual)
                pl.BlockSpec((tk, H_out), lambda i, k: (k, 0)),       # W rows (streamed)
                pl.BlockSpec((1, H_out), lambda i, k: (0, 0),         # bias (resident)
                             pipeline_mode=pl.Buffered(1)),
            ],
            out_specs=pl.BlockSpec((tile, H_out), lambda i, k: (i, 0)),
            scratch_shapes=[pltpu.VMEM((tile, H_out), jnp.float32)],
        ),
        compiler_params=pltpu.CompilerParams(
            dimension_semantics=("parallel", "arbitrary"),
            vmem_limit_bytes=vmem_limit),
    )(x1, x1, x2, w_t, b2d)


def highway_ref(x1, x2, w_t, b):
    gate = jax.nn.sigmoid(x1 @ w_t + b)
    return gate * x2 + (1.0 - gate) * x1


# ----------------------------------------------------------------------------
# Self-test
# ----------------------------------------------------------------------------

if __name__ == "__main__":
    key = jax.random.PRNGKey(0)
    k1, k2, kw, kb = jax.random.split(key, 4)

    # 1) Module-scale shapes: x_hidden = x_out_channels = 32, 16 rows (f32).
    N, H = 16, 32
    x1 = jax.random.normal(k1, (N, H), dtype=jnp.float32)
    x2 = jax.random.normal(k2, (N, H), dtype=jnp.float32)
    w_t = jax.random.normal(kw, (H, H), dtype=jnp.float32) * 0.1
    b = jax.random.normal(kb, (H,), dtype=jnp.float32) * 0.1
    ref = highway_ref(x1, x2, w_t, b)
    out = jax.block_until_ready(highway(x1, x2, w_t, b))
    assert out.shape == (N, H)
    assert jnp.allclose(out, ref, atol=1e-5, rtol=1e-5), "f32 mismatch vs. reference"

    # 2) Ragged N (no wrapper-side padding; OOB tail writes dropped), bf16 path.
    N2, H2 = 200, 128
    x1b = jax.random.normal(k1, (N2, H2), dtype=jnp.bfloat16)
    x2b = jax.random.normal(k2, (N2, H2), dtype=jnp.bfloat16)
    w2 = (jax.random.normal(kw, (H2, H2), dtype=jnp.float32) * 0.05).astype(jnp.bfloat16)
    b2 = jax.random.normal(kb, (H2,), dtype=jnp.float32) * 0.1
    ref2 = highway_ref(x1b.astype(jnp.float32), x2b.astype(jnp.float32),
                       w2.astype(jnp.float32), b2)
    out2 = jax.block_until_ready(highway(x1b, x2b, w2, b2))
    assert out2.shape == (N2, H2)
    assert jnp.allclose(out2.astype(jnp.float32), ref2, atol=5e-2, rtol=5e-2), \
        "bf16 mismatch vs. f32 reference"

    # 3) K-tiled weight-streaming path (forced here; normally auto-selected
    #    only when the resident weight would not fit VMEM, e.g. large H on v7x).
    N3, H3 = 64, 256
    x13 = jax.random.normal(k1, (N3, H3), dtype=jnp.float32)
    x23 = jax.random.normal(k2, (N3, H3), dtype=jnp.float32)
    w3 = jax.random.normal(kw, (H3, H3), dtype=jnp.float32) * 0.05
    b3 = jax.random.normal(kb, (H3,), dtype=jnp.float32) * 0.1
    ref3 = highway_ref(x13, x23, w3, b3)
    out3 = jax.block_until_ready(
        highway(x13, x23, w3, b3, force_ktiled=True, block_k=128))
    assert out3.shape == (N3, H3)
    assert jnp.allclose(out3, ref3, atol=5e-3, rtol=5e-3), \
        "K-tiled path mismatch vs. reference"

    print("KERNEL_OK")
</pallas_src>

<mosaic_0001>
module attributes {stable_mosaic.version = 11 : i64} {
  func.func @highway_kernel_resident(%arg0: i32, %arg1: memref<8x32xf32, #tpu.memory_space<vmem>>, %arg2: memref<8x32xf32, #tpu.memory_space<vmem>>, %arg3: memref<32x32xf32, #tpu.memory_space<vmem>>, %arg4: memref<1x32xf32, #tpu.memory_space<vmem>>, %arg5: memref<8x32xf32, #tpu.memory_space<vmem>>) attributes {dimension_semantics = [#tpu.dimension_semantics<parallel>], iteration_bounds = array<i64: 2>, scalar_prefetch = 0 : i64, scratch_operands = 0 : i64, tpu.core_type = #tpu.core_type<tc>, window_params = [{transform_indices = @transform_0, window_bounds = array<i64: 8, 32>}, {transform_indices = @transform_1, window_bounds = array<i64: 8, 32>}, {pipeline_mode = #tpu.pipeline_mode<synchronous>, transform_indices = @transform_2, window_bounds = array<i64: 32, 32>}, {pipeline_mode = #tpu.pipeline_mode<synchronous>, transform_indices = @transform_3, window_bounds = array<i64: 1, 32>}, {transform_indices = @transform_4, window_bounds = array<i64: 8, 32>}]} {
    %c0 = arith.constant 0 : index
    %c0_0 = arith.constant 0 : index
    %0 = vector.load %arg1[%c0, %c0_0] : memref<8x32xf32, #tpu.memory_space<vmem>>, vector<8x32xf32>
    %c0_1 = arith.constant 0 : index
    %c0_2 = arith.constant 0 : index
    %1 = vector.load %arg2[%c0_1, %c0_2] : memref<8x32xf32, #tpu.memory_space<vmem>>, vector<8x32xf32>
    %c0_3 = arith.constant 0 : index
    %c0_4 = arith.constant 0 : index
    %2 = vector.load %arg3[%c0_3, %c0_4] : memref<32x32xf32, #tpu.memory_space<vmem>>, vector<32x32xf32>
    %cst = arith.constant dense<0.000000e+00> : vector<8x32xf32>
    %3 = tpu.matmul %0, %2, %cst {dimension_numbers = #tpu.dot_dimension_numbers<[1], [0], [0], [1], [0, 0, 1, 1], [], []>} : vector<8x32xf32>, vector<32x32xf32>, vector<8x32xf32> -> vector<8x32xf32>
    %c0_5 = arith.constant 0 : index
    %c0_6 = arith.constant 0 : index
    %4 = vector.load %arg4[%c0_5, %c0_6] : memref<1x32xf32, #tpu.memory_space<vmem>>, vector<1x32xf32>
    %5 = vector.broadcast %4 : vector<1x32xf32> to vector<8x32xf32>
    %6 = arith.addf %3, %5 : vector<8x32xf32>
    %7 = arith.negf %6 : vector<8x32xf32>
    %8 = math.exp %7 : vector<8x32xf32>
    %cst_7 = arith.constant 1.000000e+00 : f32
    %9 = vector.broadcast %cst_7 : f32 to vector<8x32xf32>
    %10 = arith.addf %9, %8 : vector<8x32xf32>
    %11 = arith.divf %9, %10 : vector<8x32xf32>
    %12 = arith.subf %1, %0 : vector<8x32xf32>
    %13 = arith.mulf %11, %12 : vector<8x32xf32>
    %14 = arith.addf %0, %13 : vector<8x32xf32>
    %c0_8 = arith.constant 0 : index
    %c0_9 = arith.constant 0 : index
    %15 = vector.load %arg5[%c0_8, %c0_9] : memref<8x32xf32, #tpu.memory_space<vmem>>, vector<8x32xf32>
    tpu.vector_store %arg5[%c0_8, %c0_9], %14 {strides = array<i32>} : memref<8x32xf32, #tpu.memory_space<vmem>>, vector<8x32xf32>,
    return
  }
  func.func @transform_0(%arg0: i32) -> (i32, i32) {
    %c0_i32 = arith.constant 0 : i32
    %c0_i32_0 = arith.constant 0 : i32
    return %arg0, %c0_i32 : i32, i32
  }
  func.func @transform_1(%arg0: i32) -> (i32, i32) {
    %c0_i32 = arith.constant 0 : i32
    %c0_i32_0 = arith.constant 0 : i32
    return %arg0, %c0_i32 : i32, i32
  }
  func.func @transform_2(%arg0: i32) -> (i32, i32) {
    %c0_i32 = arith.constant 0 : i32
    %c0_i32_0 = arith.constant 0 : i32
    %c0_i32_1 = arith.constant 0 : i32
    return %c0_i32, %c0_i32_0 : i32, i32
  }
  func.func @transform_3(%arg0: i32) -> (i32, i32) {
    %c0_i32 = arith.constant 0 : i32
    %c0_i32_0 = arith.constant 0 : i32
    %c0_i32_1 = arith.constant 0 : i32
    return %c0_i32, %c0_i32_0 : i32, i32
  }
  func.func @transform_4(%arg0: i32) -> (i32, i32) {
    %c0_i32 = arith.constant 0 : i32
    %c0_i32_0 = arith.constant 0 : i32
    return %arg0, %c0_i32 : i32, i32
  }
}

</mosaic_0001>

<llo_original>
// kernel: tpu_custom_call.1
$region0: #{tpu_custom_call.1}
  #allocation0 [shape = 'u32[]', space=smem, size = 0x4, offset = 0x4, fixed_abs, tag = 'smem constant byte address 0x4 - core index']
  #allocation1 [shape = 'u32[144,128]{1,0:T(1,128)}', space=vmem, size = 0x12000, scoped, tag = 'internal scratch']
  %s0 = inlined_call_operand.hbm [shape: f32[16,32], index: 0, kind: input, shape index: {}]
  %s1 = inlined_call_operand.hbm [shape: f32[16,32], index: 1, kind: input, shape index: {}]
  %s2 = inlined_call_operand.hbm [shape: f32[32,32], index: 2, kind: input, shape index: {}]
  %s3 = inlined_call_operand.vmem [shape: f32[1,32], index: 3, kind: input, shape index: {}]
  %s4 = inlined_call_operand.hbm [shape: f32[16,32], index: 4, kind: output, shape index: {}]
  %s5 = sld [smem:[#allocation0]]
  $region61: #{tpu_custom_call.1} parent=0
    _
  %s7 = ssub.s32 1, %s5
  %s8 = scalar_select 0, %s7, %s5
  $region1: #{tpu_custom_call.1} parent=0
    #allocation2 [shape = 'u8[8192]{0}', space=vmem, size = 0x2000, scoped, tag = 'input window, operand 0']
    #allocation3 [shape = 's32[2]{0}', space=sflag, size = 0x8, scoped, tag = 'scoped memory for tpu_custom_call.1']
    #allocation4 [shape = 's32[2]{0}', space=sflag, size = 0x8, scoped, tag = 'scoped memory for tpu_custom_call.1']
    #allocation5 [shape = 'u8[8192]{0}', space=vmem, size = 0x2000, scoped, tag = 'input window, operand 1']
    #allocation6 [shape = 's32[2]{0}', space=sflag, size = 0x8, scoped, tag = 'scoped memory for tpu_custom_call.1']
    #allocation7 [shape = 'u8[16384]{0}', space=vmem, size = 0x4000, scoped, tag = 'input window, operand 2, single buffered']
    #allocation8 [shape = 'u8[8192]{0}', space=vmem, size = 0x2000, scoped, tag = 'output window, operand 0']
    %9 = vsyncpa [#allocation3], 0
    %s10 = scalar_lea.sflag [#allocation3], 1
    %11 = vsyncpa %s10, 0
    %12 = vsyncpa [#allocation6], 0
    %s13 = scalar_lea.sflag [#allocation6], 1
    %14 = vsyncpa %s13, 0
    %15 = vsyncpa [#allocation4], 0
    %s16 = scalar_lea.sflag [#allocation4], 1
    %17 = vsyncpa %s16, 0
    loop: start=0, step=1, limit=4
    $region2: #{tpu_custom_call.1} parent=1 // loop_pre_header
      _
    $region3: #{tpu_custom_call.1} parent=1 // loop_header
      %s19 = sphi 0, %s23
      %p20 = scmp.ge.s32.totalorder %s19, 4
      %s29 = sphi 0, %s31
      %s32 = sphi 0, %s29
      %s33 = sphi 0, %s32
      %s49 = sphi 0, %s33
      %s55 = sphi 0, %s57
      %s58 = sphi 0, %s55
      %s59 = sphi 0, %s58
      %s75 = sphi 0, %s59
      %s79 = sphi 0, %s79
      %s81 = sphi 0, %s79
      %s82 = sphi 0, %s81
      %s96 = sphi 0, %s82
      %s100 = sphi 0, %s100
      %s102 = sphi 0, %s100
      %s103 = sphi 0, %s102
      %s117 = sphi 0, %s103
      %s123 = sphi 0, %s125
      %s126 = sphi 0, %s123
      %s127 = sphi 0, %s126
      %s143 = sphi 0, %s127
    $region4: #{tpu_custom_call.1} parent=1 // loop_header_branch
      %22 = sbr.rel (%p20) target = $region8
    $region5: #{tpu_custom_call.1} parent=1 // loop_body
      %s24 = ssub.s32 %s19, 1
      %s25 = ssub.s32 %s19, 2
      %s26 = sadd.s32 %s19, 1
      %s27 = ssub.s32 %s19, %s26
      %p28 = scmp.eq.s32.totalorder %s27, 0
      %s30 = sadd.s32 %s29, 1
      %s31 = scalar_select %p28, %s29, %s30
      %p34 = pneg %p28
      %p35 = scmp.eq.s32.totalorder %s19, 1
      %p36 = por %p34, %p35
      %p37 = scmp.ne.s32.totalorder %s29, %s32
      %p38 = scmp.eq.s32.totalorder %s19, 0
      %p39 = por %p37, %p38
      %p40 = scmp.ne.s32.totalorder %s29, %s32
      %p41 = scmp.eq.s32.totalorder %s24, 1
      %p42 = por %p40, %p41
      %p43 = scmp.ne.s32.totalorder %s32, %s33
      %p44 = scmp.eq.s32.totalorder %s24, 0
      %p45 = por %p43, %p44
      %p46 = scmp.ne.s32.totalorder %s32, %s33
      %p47 = scmp.eq.s32.totalorder %s25, 1
      %p48 = por %p46, %p47
      %p50 = scmp.ne.s32.totalorder %s33, %s49
      %p51 = scmp.eq.s32.totalorder %s25, 0
      %p52 = por %p50, %p51
      %s53 = ssub.s32 %s19, %s26
      %p54 = scmp.eq.s32.totalorder %s53, 0
      %s56 = sadd.s32 %s55, 1
      %s57 = scalar_select %p54, %s55, %s56
      %p60 = pneg %p54
      %p61 = scmp.eq.s32.totalorder %s19, 1
      %p62 = por %p60, %p61
      %p63 = scmp.ne.s32.totalorder %s55, %s58
      %p64 = scmp.eq.s32.totalorder %s19, 0
      %p65 = por %p63, %p64
      %p66 = scmp.ne.s32.totalorder %s55, %s58
      %p67 = scmp.eq.s32.totalorder %s24, 1
      %p68 = por %p66, %p67
      %p69 = scmp.ne.s32.totalorder %s58, %s59
      %p70 = scmp.eq.s32.totalorder %s24, 0
      %p71 = por %p69, %p70
      %p72 = scmp.ne.s32.totalorder %s58, %s59
      %p73 = scmp.eq.s32.totalorder %s25, 1
      %p74 = por %p72, %p73
      %p76 = scmp.ne.s32.totalorder %s59, %s75
      %p77 = scmp.eq.s32.totalorder %s25, 0
      %p78 = por %p76, %p77
      %s80 = sadd.s32 %s79, 1
      %p83 = scmp.eq.s32.totalorder %s19, 1
      %p84 = scmp.ne.s32.totalorder %s79, %s81
      %p85 = scmp.eq.s32.totalorder %s19, 0
      %p86 = por %p84, %p85
      %p87 = scmp.ne.s32.totalorder %s79, %s81
      %p88 = scmp.eq.s32.totalorder %s24, 1
      %p89 = por %p87, %p88
      %p90 = scmp.ne.s32.totalorder %s81, %s82
      %p91 = scmp.eq.s32.totalorder %s24, 0
      %p92 = por %p90, %p91
      %p93 = scmp.ne.s32.totalorder %s81, %s82
      %p94 = scmp.eq.s32.totalorder %s25, 1
      %p95 = por %p93, %p94
      %p97 = scmp.ne.s32.totalorder %s82, %s96
      %p98 = scmp.eq.s32.totalorder %s25, 0
      %p99 = por %p97, %p98
      %s101 = sadd.s32 %s100, 1
      %p104 = scmp.eq.s32.totalorder %s19, 1
      %p105 = scmp.ne.s32.totalorder %s100, %s102
      %p106 = scmp.eq.s32.totalorder %s19, 0
      %p107 = por %p105, %p106
      %p108 = scmp.ne.s32.totalorder %s100, %s102
      %p109 = scmp.eq.s32.totalorder %s24, 1
      %p110 = por %p108, %p109
      %p111 = scmp.ne.s32.totalorder %s102, %s103
      %p112 = scmp.eq.s32.totalorder %s24, 0
      %p113 = por %p111, %p112
      %p114 = scmp.ne.s32.totalorder %s102, %s103
      %p115 = scmp.eq.s32.totalorder %s25, 1
      %p116 = por %p114, %p115
      %p118 = scmp.ne.s32.totalorder %s103, %s117
      %p119 = scmp.eq.s32.totalorder %s25, 0
      %p120 = por %p118, %p119
      %s121 = ssub.s32 %s19, %s26
      %p122 = scmp.eq.s32.totalorder %s121, 0
      %s124 = sadd.s32 %s123, 1
      %s125 = scalar_select %p122, %s123, %s124
      %p128 = pneg %p122
      %p129 = scmp.eq.s32.totalorder %s19, 1
      %p130 = por %p128, %p129
      %p131 = scmp.ne.s32.totalorder %s123, %s126
      %p132 = scmp.eq.s32.totalorder %s19, 0
      %p133 = por %p131, %p132
      %p134 = scmp.ne.s32.totalorder %s123, %s126
      %p135 = scmp.eq.s32.totalorder %s24, 1
      %p136 = por %p134, %p135
      %p137 = scmp.ne.s32.totalorder %s126, %s127
      %p138 = scmp.eq.s32.totalorder %s24, 0
      %p139 = por %p137, %p138
      %p140 = scmp.ne.s32.totalorder %s126, %s127
      %p141 = scmp.eq.s32.totalorder %s25, 1
      %p142 = por %p140, %p141
      %p144 = scmp.ne.s32.totalorder %s127, %s143
      %p145 = scmp.eq.s32.totalorder %s25, 0
      %p146 = por %p144, %p145
      %p147 = scmp.le.s32.totalorder 1, %s19
      %p148 = scmp.lt.s32.totalorder %s19, 3
      %p149 = pnand %p147, %p148
      %p150 = pneg %p149
      // Predicated region
      $region9: #{tpu_custom_call.1} parent=5 // pred_check
        _
      $region10: #{tpu_custom_call.1} parent=5 // pred_check_branch
        %152 = sbr.rel (%p149) target = $region12
      $region11: #{tpu_custom_call.1} parent=5 // pred_region
        %s153 = ssub.s32 %s19, 1
        // Predicated region
        $region13: #{tpu_custom_call.1} parent=11 // pred_check
          %p154 = pneg %p92
        $region14: #{tpu_custom_call.1} parent=11 // pred_check_branch
          %156 = sbr.rel (%p154) target = $region16
        $region15: #{tpu_custom_call.1} parent=11 // pred_region
          %s158 = ssub.s32 512, 512
          %159 = vsyncadd [#allocation6], %s158
          %s160 = sshll.u32 [#allocation7], 4
          %s161 = int_to_ptr.vmem [resolvable:$true] %s160
          %166 = dma.hbm_to_vmem [thread:$0]  %s2, 512, %s161, [#allocation6], 128, 128, 8
        $region16: #{tpu_custom_call.1} parent=11 // pred_fallthru
          _
        // Predicated region
        $region17: #{tpu_custom_call.1} parent=11 // pred_check
          %p167 = pneg %p113
        $region18: #{tpu_custom_call.1} parent=11 // pred_check_branch
          %169 = sbr.rel (%p167) target = $region20
        $region19: #{tpu_custom_call.1} parent=11 // pred_region
          _
        $region20: #{tpu_custom_call.1} parent=11 // pred_fallthru
          _
      $region12: #{tpu_custom_call.1} parent=5 // pred_fallthru
        _
      %p170 = scmp.lt.s32.totalorder %s19, 2
      // Predicated region
      $region21: #{tpu_custom_call.1} parent=5 // pred_check
        %p171 = pneg %p170
      $region22: #{tpu_custom_call.1} parent=5 // pred_check_branch
        %173 = sbr.rel (%p171) target = $region24
      $region23: #{tpu_custom_call.1} parent=5 // pred_region
        // Predicated region
        $region25: #{tpu_custom_call.1} parent=23 // pred_check
          %p174 = pneg %p39
        $region26: #{tpu_custom_call.1} parent=23 // pred_check_branch
          %176 = sbr.rel (%p174) target = $region28
        $region27: #{tpu_custom_call.1} parent=23 // pred_region
          %s177 = sand.u32 %s29, 1
          %s178 = scalar_lea.sflag [#allocation3], %s177
          %s179 = sand.u32 %s29, 1
          %s180 = smul.addr %s179, 8
          %s181 = scalar_lea.vmem [#allocation2], %s180
          %s183 = ssub.s32 128, 128
          %184 = vsyncadd %s178, %s183
          %s185 = smul.addr %s19, 128
          %s186 = scalar_lea.hbm %s0, %s185
          %s188 = sshll.u32 %s181, 4
          %s189 = int_to_ptr.vmem [resolvable:$true] %s188
          %191 = dma.hbm_to_vmem [thread:$0]  %s186, 128, %s189, %s178
        $region28: #{tpu_custom_call.1} parent=23 // pred_fallthru
          _
        // Predicated region
        $region29: #{tpu_custom_call.1} parent=23 // pred_check
          %p192 = pneg %p65
        $region30: #{tpu_custom_call.1} parent=23 // pred_check_branch
          %194 = sbr.rel (%p192) target = $region32
        $region31: #{tpu_custom_call.1} parent=23 // pred_region
          %s195 = sand.u32 %s19, 1
          %s196 = scalar_lea.sflag [#allocation6], %s195
          %s197 = sand.u32 %s55, 1
          %s198 = smul.addr %s197, 8
          %s199 = scalar_lea.vmem [#allocation5], %s198
          %s201 = ssub.s32 128, 128
          %202 = vsyncadd %s196, %s201
          %s203 = smul.addr %s19, 128
          %s204 = scalar_lea.hbm %s1, %s203
          %s206 = sshll.u32 %s199, 4
          %s207 = int_to_ptr.vmem [resolvable:$true] %s206
          %209 = dma.hbm_to_vmem [thread:$0]  %s204, 128, %s207, %s196
        $region32: #{tpu_custom_call.1} parent=23 // pred_fallthru
          _
      $region24: #{tpu_custom_call.1} parent=5 // pred_fallthru
        _
      %p210 = scmp.le.s32.totalorder 1, %s19
      %p211 = scmp.lt.s32.totalorder %s19, 3
      %p212 = pnand %p210, %p211
      %p213 = pneg %p212
      // Predicated region
      $region33: #{tpu_custom_call.1} parent=5 // pred_check
        _
      $region34: #{tpu_custom_call.1} parent=5 // pred_check_branch
        %215 = sbr.rel (%p212) target = $region36
      $region35: #{tpu_custom_call.1} parent=5 // pred_region
        %s216 = ssub.s32 %s19, 1
        %s217 = sand.u32 %s32, 1
        %s218 = scalar_lea.sflag [#allocation3], %s217
        %s219 = sand.u32 %s32, 1
        %s220 = smul.addr %s219, 8
        %s221 = scalar_lea.vmem [#allocation2], %s220
        // Predicated region
        $region37: #{tpu_custom_call.1} parent=35 // pred_check
          %p222 = pneg %p45
        $region38: #{tpu_custom_call.1} parent=35 // pred_check_branch
          %224 = sbr.rel (%p222) target = $region40
        $region39: #{tpu_custom_call.1} parent=35 // pred_region
          %225 = dma.done %s218, 128
        $region40: #{tpu_custom_call.1} parent=35 // pred_fallthru
          _
        %s226 = sand.u32 %s24, 1
        %s227 = scalar_lea.sflag [#allocation6], %s226
        %s228 = sand.u32 %s58, 1
        %s229 = smul.addr %s228, 8
        %s230 = scalar_lea.vmem [#allocation5], %s229
        // Predicated region
        $region41: #{tpu_custom_call.1} parent=35 // pred_check
          %p231 = pneg %p71
        $region42: #{tpu_custom_call.1} parent=35 // pred_check_branch
          %233 = sbr.rel (%p231) target = $region44
        $region43: #{tpu_custom_call.1} parent=35 // pred_region
          %234 = dma.done %s227, 128
        $region44: #{tpu_custom_call.1} parent=35 // pred_fallthru
          _
        // Predicated region
        $region45: #{tpu_custom_call.1} parent=35 // pred_check
          %p235 = pneg %p92
        $region46: #{tpu_custom_call.1} parent=35 // pred_check_branch
          %237 = sbr.rel (%p235) target = $region48
        $region47: #{tpu_custom_call.1} parent=35 // pred_region
          %238 = dma.done [#allocation6], 512
        $region48: #{tpu_custom_call.1} parent=35 // pred_fallthru
          _
        %s239 = sand.u32 %s32, 1
        %s240 = scalar_lea.sflag [#allocation3], %s239
        %s241 = sand.u32 %s32, 1
        %s242 = smul.addr %s241, 8
        %s243 = scalar_lea.vmem [#allocation2], %s242
        %p244 = pneg %p45
        %p245 = pneg %p42
        %s246 = sand.u32 %s24, 1
        %s247 = scalar_lea.sflag [#allocation6], %s246
        %s248 = sand.u32 %s58, 1
        %s249 = smul.addr %s248, 8
        %s250 = scalar_lea.vmem [#allocation5], %s249
        %p251 = pneg %p71
        %p252 = pneg %p68
        %p253 = pneg %p92
        %p254 = pneg %p89
        %p255 = pneg %p113
        %p256 = pneg %p110
        %p257 = pneg %p139
        %p258 = pneg %p136
        %s259 = sand.u32 %s126, 1
        %s260 = scalar_lea.sflag [#allocation4], %s259
        %s261 = sand.u32 %s126, 1
        %s262 = smul.addr %s261, 8
        %s263 = scalar_lea.vmem [#allocation8], %s262
        %v264 = vld [vmem:[%s221] sm:$0xff]
        %v265 = vld [vmem:[%s230] sm:$0xff]
        %v266 = vld [vmem:[#allocation7] sm:$0xff]
        %v267 = vld [vmem:[#allocation7 + $0x8] sm:$0xff]
        %v268 = vld [vmem:[#allocation7 + $0x10] sm:$0xff]
        %v269 = vld [vmem:[#allocation7 + $0x18] sm:$0xff]
        %v270 = vld [vmem:[%s3] sm:$0x1]
        %v272 = vlaneseq
        %v273 = vshrl.u32 %v272, 7
        %v274 = vsub.s32 0, %v273
        %v275 = vrot.slane %v270, %v274
        %vm277 = vcmask 261120
        %v279 = vsel %vm277, %v264, 0
        %281 = vmatprep.subr.mxu0 0.0
        %282 = vmatpush1.msra.mxu0 %v266
        %283 = vmatprep.subr.mxu0 0.0
        %284 = vmatpush1.msra.mxu0 %v267
        %285 = vmatprep.subr.mxu0 0.0
        %286 = vmatpush1.msra.mxu0 %v268
        %287 = vmatprep.subr.mxu0 0.0
        %288 = vmatpush1.msra.mxu0 %v269
        %289 = vmatprep.subr.mxu0 0.0
        %290 = vmatpush1.msra.mxu0 0.0
        %291 = vmatprep.subr.mxu0 0.0
        %292 = vmatpush1.msra.mxu0 0.0
        %293 = vmatprep.subr.mxu0 0.0
        %294 = vmatpush1.msra.mxu0 0.0
        %295 = vmatprep.subr.mxu0 0.0
        %296 = vmatpush1.msra.mxu0 0.0
        %297 = vmatprep.subr.mxu0 0.0
        %298 = vmatpush1.msra.mxu0 0.0
        %299 = vmatprep.subr.mxu0 0.0
        %300 = vmatpush1.msra.mxu0 0.0
        %301 = vmatprep.subr.mxu0 0.0
        %302 = vmatpush1.msra.mxu0 0.0
        %303 = vmatprep.subr.mxu0 0.0
        %304 = vmatpush1.msra.mxu0 0.0
        %305 = vmatprep.subr.mxu0 0.0
        %306 = vmatpush1.msra.mxu0 0.0
        %307 = vmatprep.subr.mxu0 0.0
        %308 = vmatpush1.msra.mxu0 0.0
        %309 = vmatprep.subr.mxu0 0.0
        %310 = vmatpush1.msra.mxu0 0.0
        %311 = vmatprep.subr.mxu0 0.0
        %312 = vmatpush1.msra.mxu0 0.0
        %313 = vmatprep.subr.mxu0 0.0
        %314 = vmatpush1.msra.mxu0 0.0
        %315 = vmatprep.subr.mxu0 0.0
        %316 = vmatpush1.msra.mxu0 0.0
        %317 = vmatprep.subr.mxu0 0.0
        %318 = vmatpush1.msra.mxu0 0.0
        %319 = vmatprep.subr.mxu0 0.0
        %320 = vmatpush1.msra.mxu0 0.0
        %321 = vmatprep.subr.mxu0 0.0
        %322 = vmatpush1.msra.mxu0 0.0
        %323 = vmatprep.subr.mxu0 0.0
        %324 = vmatpush1.msra.mxu0 0.0
        %325 = vmatprep.subr.mxu0 0.0
        %326 = vmatpush1.msra.mxu0 0.0
        %327 = vmatprep.subr.mxu0 0.0
        %328 = vmatpush1.msra.mxu0 0.0
        %329 = vmatprep.subr.mxu0 0.0
        %330 = vmatpush1.msra.mxu0 0.0
        %331 = vmatprep.subr.mxu0 0.0
        %332 = vmatpush1.msra.mxu0 0.0
        %333 = vmatprep.subr.mxu0 0.0
        %334 = vmatpush1.msra.mxu0 0.0
        %335 = vmatprep.subr.mxu0 0.0
        %336 = vmatpush1.msra.mxu0 0.0
        %337 = vmatprep.subr.mxu0 0.0
        %338 = vmatpush1.msra.mxu0 0.0
        %339 = vmatprep.subr.mxu0 0.0
        %340 = vmatpush1.msra.mxu0 0.0
        %341 = vmatprep.subr.mxu0 0.0
        %342 = vmatpush1.msra.mxu0 0.0
        %343 = vmatprep.subr.mxu0 0.0
        %344 = vmatpush1.msra.mxu0 0.0
        %345 = vmatprep.mubr.f32.mxu0 0.0
        %346 = vmatmul.mubr.f32.gmra.mrb[0].mxu0 %v279
        %v347 = vpop.f32.mrb[0].mxu0
        %v348 = vadd.f32 %v275, %v347
        %v349 = vpop.f32.mrb[0].mxu0
        %350 = vdwg.mxu0
        %v351 = vxor.u32 %v348, 2147483648
        %v352 = vmul.f32 %v351, 1.442695
        %v353 = vpow.pop %v352
        %v354 = vadd.f32 %v353, 1.0
        %v355 = vrcp.pop %v354
        %v356 = vmul.f32 1.0, %v355
        %v357 = vsub.f32 %v265, %v264
        %v358 = vmul.f32 %v356, %v357
        %v359 = vadd.f32 %v264, %v358
        %360 = vst.msk [vmem:[%s263] sm:$0xff] %vm277, %v359
        %s361 = sand.u32 %s126, 1
        %s362 = scalar_lea.sflag [#allocation4], %s361
        %s363 = sand.u32 %s126, 1
        %s364 = smul.addr %s363, 8
        %s365 = scalar_lea.vmem [#allocation8], %s364
        // Predicated region
        $region49: #{tpu_custom_call.1} parent=35 // pred_check
          %p366 = pneg %p136
        $region50: #{tpu_custom_call.1} parent=35 // pred_check_branch
          %368 = sbr.rel (%p366) target = $region52
        $region51: #{tpu_custom_call.1} parent=35 // pred_region
          %s370 = ssub.s32 128, 128
          %371 = vsyncadd %s362, %s370
          %s372 = smul.addr %s24, 128
          %s373 = scalar_lea.hbm %s4, %s372
          %s375 = sshll.u32 %s365, 4
          %s376 = int_to_ptr.vmem [resolvable:$true] %s375
          %378 = dma.vmem_to_hbm [thread:$0]  %s376, 128, %s373, %s362
        $region52: #{tpu_custom_call.1} parent=35 // pred_fallthru
          _
      $region36: #{tpu_custom_call.1} parent=5 // pred_fallthru
        _
      %p379 = scmp.le.s32.totalorder 2, %s19
      // Predicated region
      $region53: #{tpu_custom_call.1} parent=5 // pred_check
        %p380 = pneg %p379
      $region54: #{tpu_custom_call.1} parent=5 // pred_check_branch
        %382 = sbr.rel (%p380) target = $region56
      $region55: #{tpu_custom_call.1} parent=5 // pred_region
        %s383 = ssub.s32 %s19, 2
        // Predicated region
        $region57: #{tpu_custom_call.1} parent=55 // pred_check
          %p384 = pneg %p142
        $region58: #{tpu_custom_call.1} parent=55 // pred_check_branch
          %386 = sbr.rel (%p384) target = $region60
        $region59: #{tpu_custom_call.1} parent=55 // pred_region
          %s387 = sand.u32 %s127, 1
          %s388 = scalar_lea.sflag [#allocation4], %s387
          %s389 = sand.u32 %s127, 1
          %s390 = smul.addr %s389, 8
          %s391 = scalar_lea.vmem [#allocation8], %s390
          %392 = dma.done %s388, 128
        $region60: #{tpu_custom_call.1} parent=55 // pred_fallthru
          _
      $region56: #{tpu_custom_call.1} parent=5 // pred_fallthru
        _
    $region6: #{tpu_custom_call.1} parent=1 // loop_footer
      %s23 = sadd.s32 1, %s19
    $region7: #{tpu_custom_call.1} parent=1 // loop_footer_branch
      %18 = sbr.rel target = $region3
    $region8: #{tpu_custom_call.1} parent=1 // loop_exit
      _
    %393 = vsyncpa [#allocation3], 1
    %s394 = scalar_lea.sflag [#allocation3], 1
    %395 = vsyncpa %s394, 1
    %396 = vsyncpa [#allocation6], 1
    %s397 = scalar_lea.sflag [#allocation6], 1
    %398 = vsyncpa %s397, 1
    %399 = vsyncpa [#allocation4], 1
    %s400 = scalar_lea.sflag [#allocation4], 1
    %401 = vsyncpa %s400, 1

</llo_original>
